<compile_context>
chip_gen: v7x
topology: tpu7x:2x2x1
jax: 0.10.0
libtpu: 0.0.40
codegen_flags: <defaults>
</compile_context>

<pallas_src>
import jax
import jax.numpy as jnp
from jax import lax
from jax.experimental import pallas as pl
from jax.experimental.pallas import tpu as pltpu

BN_EPS = 1e-5
MIB = 1 << 20


def _round_up(x, m):
    return (x + m - 1) // m * m


def _pad_to(a, shape):
    pads = [(0, t - s) for s, t in zip(a.shape, shape)]
    if all(p == (0, 0) for p in pads):
        return a
    return jnp.pad(a, pads)


def _vmem_capacity_bytes():
    # 128 MiB on v5e/v6e, 64 MiB per TensorCore on v7x.
    try:
        return int(pltpu.get_tpu_info().vmem_capacity_bytes)
    except Exception:
        return 64 * MIB  # conservative fallback


def _bn_relu(h, g, beta):
    """Training-mode BatchNorm folded to one scale/shift, then ReLU (all f32)."""
    mean = jnp.mean(h, axis=0, keepdims=True)
    d = h - mean
    var = jnp.mean(d * d, axis=0, keepdims=True)          # biased, like PyTorch
    scale = g * lax.rsqrt(var + BN_EPS)
    shift = beta - mean * scale
    return jnp.maximum(h * scale + shift, 0.0)


def fused_mlp_kernel(x_ref, w1_ref, g_ref, beta_ref, w2_ref, b2_ref, o_ref):
    # Linear 1 (bias omitted: it cancels exactly under training-mode BN).
    h = jnp.dot(x_ref[...], w1_ref[...], preferred_element_type=jnp.float32)
    hr = _bn_relu(h, g_ref[...], beta_ref[...])
    # Linear 2 + bias, written to the lane-dense (padded) output in one shot.
    o_ref[...] = (
        jnp.dot(hr.astype(w2_ref.dtype), w2_ref[...],
                preferred_element_type=jnp.float32)
        + b2_ref[...])


def tiled_mlp_kernel(x_ref, w1_ref, g_ref, beta_ref, w2_ref, b2_ref, o_ref):
    k = pl.program_id(0)

    @pl.when(k == 0)
    def _():
        # Fold b2 into the accumulator init (the output block is resident
        # across the "arbitrary" H axis, so we accumulate directly into it).
        o_ref[...] = jnp.broadcast_to(b2_ref[...], o_ref.shape)

    h = jnp.dot(x_ref[...], w1_ref[...], preferred_element_type=jnp.float32)
    hr = _bn_relu(h, g_ref[...], beta_ref[...])
    o_ref[...] += jnp.dot(hr.astype(w2_ref.dtype), w2_ref[...],
                          preferred_element_type=jnp.float32)


def byol_mlp(x, w1, b1, gamma, beta, w2, b2, *,
             weights_dtype=jnp.bfloat16, tile_h=None, force_tiled=False,
             weight_buffers=2):
    """Forward pass of MLP(dim, projection_size, hidden_size).

    weights_dtype: storage dtype for W1/W2 streamed into the kernel (bf16 by
      default to halve weight DMA); all accumulation / BN math stays f32.
    tile_h: hidden-dim tile for the K-tiled path; None = derive from VMEM.
    weight_buffers: pipeline depth for W1/W2 tiles in the tiled path (2 =
      default double buffering; 3 = extra lookahead if DMA is exposed).
    """
    # b1 is accepted for API parity but never loaded: a constant per-feature
    # bias before training-mode BatchNorm is removed with the batch mean.
    del b1

    N, D = x.shape
    H = w1.shape[1]
    P = w2.shape[1]

    # Lane-aligned padding: D -> multiple of 128 (zero-padded x cols / W1 rows
    # contribute exactly 0), P -> multiple of 128 so every output store is a
    # full-width lane-dense vst. The padded columns are sliced off outside.
    Dp = _round_up(D, 128)
    Pp = _round_up(P, 128)

    wdt = jnp.dtype(weights_dtype)
    x_p = _pad_to(x, (N, Dp))
    w1_p = _pad_to(w1, (Dp, H)).astype(wdt)
    w2_p = _pad_to(w2, (H, Pp)).astype(wdt)
    b2_p = _pad_to(b2.reshape(1, P).astype(jnp.float32), (1, Pp))
    g_2d = gamma.reshape(1, H).astype(jnp.float32)
    bt_2d = beta.reshape(1, H).astype(jnp.float32)

    xb = x_p.dtype.itemsize
    wb = wdt.itemsize
    f32 = 4

    vmem_cap = _vmem_capacity_bytes()

    def _limit(bytes_needed):
        # Generous but generation-aware: never above 3/4 of physical VMEM
        # (~96 MiB on v5e/v6e, ~48 MiB on v7x), never below the 32 MiB default.
        return int(min(max(2 * bytes_needed, 32 * MIB), (vmem_cap * 3) // 4))

    # ---------------- fused single-step path ----------------
    weight_bytes = wb * (Dp * H + H * Pp)
    fused_bytes = (2 * (xb * N * Dp + weight_bytes + f32 * (2 * H + Pp))
                   + f32 * N * H + 2 * f32 * N * Pp)
    # grid=(1,) has zero DMA/compute overlap -> only take it when the weight
    # traffic is tiny and everything fits comfortably.
    fused_budget = min((vmem_cap * 2) // 5, 56 * MIB)
    use_fused = ((not force_tiled)
                 and weight_bytes <= 4 * MIB
                 and fused_bytes <= fused_budget)

    if use_fused:
        out_p = pl.pallas_call(
            fused_mlp_kernel,
            out_shape=jax.ShapeDtypeStruct((N, Pp), jnp.float32),
            grid_spec=pltpu.PrefetchScalarGridSpec(
                num_scalar_prefetch=0,
                grid=(1,),
                in_specs=[
                    pl.BlockSpec((N, Dp), lambda k: (0, 0)),    # x (full)
                    pl.BlockSpec((Dp, H), lambda k: (0, 0)),    # W1 (full)
                    pl.BlockSpec((1, H), lambda k: (0, 0)),     # gamma
                    pl.BlockSpec((1, H), lambda k: (0, 0)),     # beta
                    pl.BlockSpec((H, Pp), lambda k: (0, 0)),    # W2 (padded P)
                    pl.BlockSpec((1, Pp), lambda k: (0, 0)),    # b2 (padded P)
                ],
                out_specs=pl.BlockSpec((N, Pp), lambda k: (0, 0)),
            ),
            compiler_params=pltpu.CompilerParams(
                dimension_semantics=("arbitrary",),
                vmem_limit_bytes=_limit(fused_bytes)),
        )(x_p, w1_p, g_2d, bt_2d, w2_p, b2_p)
        return out_p[:, :P].astype(x.dtype)

    # ---------------- K-tiled (hidden dim) pipelined path ----------------
    if tile_h is None:
        # Largest multiple of 256 such that the resident x / output plus the
        # (multi-)buffered per-step weight & activation tiles fit ~60% of VMEM.
        tiled_budget = (vmem_cap * 3) // 5
        resident = 2 * xb * N * Dp + f32 * N * Pp + 2 * f32 * Pp
        per_col = (weight_buffers * (wb * (Dp + Pp) + 2 * f32)   # W1 col, W2 row, g/b
                   + 2 * f32 * N)                                # h, hr columns (f32)
        avail = max(tiled_budget - resident, 256 * per_col)
        tile_h = max(256, (avail // per_col) // 256 * 256)
    tile_h = int(min(tile_h, _round_up(H, 256)))
    assert tile_h % 128 == 0

    Hp = _round_up(H, tile_h)
    w1_t = _pad_to(w1_p, (Dp, Hp))
    g_t = _pad_to(g_2d, (1, Hp))       # zero-padded gamma -> scale 0 ->
    bt_t = _pad_to(bt_2d, (1, Hp))     # padded features contribute exactly 0
    w2_t = _pad_to(w2_p, (Hp, Pp))

    step_bytes = (2 * xb * N * Dp
                  + weight_buffers * (wb * (Dp * tile_h + tile_h * Pp)
                                      + 2 * f32 * tile_h)
                  + f32 * (Pp + 2 * N * tile_h + N * Pp))

    # Optional deeper pipelining on the streaming weight tiles (opt-in; useful
    # when per-step compute is tiny and tile DMA latency is exposed).
    w_spec_kw = {}
    if weight_buffers != 2:
        w_spec_kw = dict(pipeline_mode=pl.Buffered(weight_buffers))

    out_p = pl.pallas_call(
        tiled_mlp_kernel,
        out_shape=jax.ShapeDtypeStruct((N, Pp), jnp.float32),
        grid_spec=pltpu.PrefetchScalarGridSpec(
            num_scalar_prefetch=0,
            grid=(Hp // tile_h,),
            in_specs=[
                pl.BlockSpec((N, Dp), lambda k: (0, 0)),               # x (full)
                pl.BlockSpec((Dp, tile_h), lambda k: (0, k), **w_spec_kw),  # W1 tile
                pl.BlockSpec((1, tile_h), lambda k: (0, k)),           # gamma tile
                pl.BlockSpec((1, tile_h), lambda k: (0, k)),           # beta tile
                pl.BlockSpec((tile_h, Pp), lambda k: (k, 0), **w_spec_kw),   # W2 tile
                pl.BlockSpec((1, Pp), lambda k: (0, 0)),               # b2
            ],
            out_specs=pl.BlockSpec((N, Pp), lambda k: (0, 0)),
        ),
        compiler_params=pltpu.CompilerParams(
            dimension_semantics=("arbitrary",),
            vmem_limit_bytes=_limit(step_bytes)),
    )(x_p, w1_t, g_t, bt_t, w2_t, b2_p)

    return out_p[:, :P].astype(x.dtype)


def byol_mlp_ref(x, w1, b1, gamma, beta, w2, b2):
    h = x @ w1 + b1
    mean = jnp.mean(h, axis=0, keepdims=True)
    var = jnp.mean((h - mean) ** 2, axis=0, keepdims=True)
    hn = (h - mean) / jnp.sqrt(var + BN_EPS) * gamma + beta
    hr = jnp.maximum(hn, 0.0)
    return hr @ w2 + b2


if __name__ == "__main__":
    # Small shapes consistent with MLP(dim, projection_size, hidden_size)
    N, DIM, HIDDEN, PROJ = 8, 32, 256, 64

    key = jax.random.PRNGKey(0)
    k1, k2, k3, k4, k5 = jax.random.split(key, 5)

    x = jax.random.normal(k1, (N, DIM), dtype=jnp.float32)

    bound1 = 1.0 / (DIM ** 0.5)
    w1 = jax.random.uniform(k2, (DIM, HIDDEN), jnp.float32, -bound1, bound1)
    b1 = jax.random.uniform(k3, (HIDDEN,), jnp.float32, -bound1, bound1)

    gamma = jnp.ones((HIDDEN,), jnp.float32)   # BatchNorm1d affine weight
    beta = jnp.zeros((HIDDEN,), jnp.float32)   # BatchNorm1d affine bias

    bound2 = 1.0 / (HIDDEN ** 0.5)
    w2 = jax.random.uniform(k4, (HIDDEN, PROJ), jnp.float32, -bound2, bound2)
    b2 = jax.random.uniform(k5, (PROJ,), jnp.float32, -bound2, bound2)

    ref = byol_mlp_ref(x, w1, b1, gamma, beta, w2, b2)

    # 1) f32-weight fused path: must match the reference tightly.
    out_f32 = jax.block_until_ready(
        byol_mlp(x, w1, b1, gamma, beta, w2, b2, weights_dtype=jnp.float32))
    assert out_f32.shape == (N, PROJ)
    assert jnp.allclose(out_f32, ref, atol=1e-4, rtol=1e-4), (
        float(jnp.max(jnp.abs(out_f32 - ref))))

    # 2) Default bf16-weight fused path (looser tolerance: bf16 weight rounding).
    out_bf = jax.block_until_ready(byol_mlp(x, w1, b1, gamma, beta, w2, b2))
    assert out_bf.shape == (N, PROJ)
    assert jnp.allclose(out_bf, ref, atol=5e-2, rtol=5e-2), (
        float(jnp.max(jnp.abs(out_bf - ref))))

    # 3) Forced K-tiled path with auto-derived tile_h (bf16 weights).
    out_t = jax.block_until_ready(
        byol_mlp(x, w1, b1, gamma, beta, w2, b2, force_tiled=True))
    assert out_t.shape == (N, PROJ)
    assert jnp.allclose(out_t, ref, atol=5e-2, rtol=5e-2), (
        float(jnp.max(jnp.abs(out_t - ref))))

    # 4) Forced K-tiled, explicit small tile -> multi-step grid, f32 weights.
    out_t2 = jax.block_until_ready(
        byol_mlp(x, w1, b1, gamma, beta, w2, b2,
                 weights_dtype=jnp.float32, force_tiled=True, tile_h=128))
    assert out_t2.shape == (N, PROJ)
    assert jnp.allclose(out_t2, ref, atol=1e-4, rtol=1e-4), (
        float(jnp.max(jnp.abs(out_t2 - ref))))

    print("KERNEL_OK")
</pallas_src>

<mosaic_0001>
module attributes {stable_mosaic.version = 11 : i64} {
  func.func @fused_mlp_kernel(%arg0: i32, %arg1: memref<8x128xf32, #tpu.memory_space<vmem>>, %arg2: memref<128x256xf32, #tpu.memory_space<vmem>>, %arg3: memref<1x256xf32, #tpu.memory_space<vmem>>, %arg4: memref<1x256xf32, #tpu.memory_space<vmem>>, %arg5: memref<256x128xf32, #tpu.memory_space<vmem>>, %arg6: memref<1x128xf32, #tpu.memory_space<vmem>>, %arg7: memref<8x128xf32, #tpu.memory_space<vmem>>) attributes {dimension_semantics = [#tpu.dimension_semantics<arbitrary>], iteration_bounds = array<i64: 1>, scalar_prefetch = 0 : i64, scratch_operands = 0 : i64, tpu.core_type = #tpu.core_type<tc>, window_params = [{pipeline_mode = #tpu.pipeline_mode<synchronous>, transform_indices = @transform_0, window_bounds = array<i64: 8, 128>}, {pipeline_mode = #tpu.pipeline_mode<synchronous>, transform_indices = @transform_1, window_bounds = array<i64: 128, 256>}, {pipeline_mode = #tpu.pipeline_mode<synchronous>, transform_indices = @transform_2, window_bounds = array<i64: 1, 256>}, {pipeline_mode = #tpu.pipeline_mode<synchronous>, transform_indices = @transform_3, window_bounds = array<i64: 1, 256>}, {pipeline_mode = #tpu.pipeline_mode<synchronous>, transform_indices = @transform_4, window_bounds = array<i64: 256, 128>}, {pipeline_mode = #tpu.pipeline_mode<synchronous>, transform_indices = @transform_5, window_bounds = array<i64: 1, 128>}, {pipeline_mode = #tpu.pipeline_mode<synchronous>, transform_indices = @transform_6, window_bounds = array<i64: 8, 128>}]} {
    %c0 = arith.constant 0 : index
    %c0_0 = arith.constant 0 : index
    %0 = vector.load %arg1[%c0, %c0_0] : memref<8x128xf32, #tpu.memory_space<vmem>>, vector<8x128xf32>
    %c0_1 = arith.constant 0 : index
    %c0_2 = arith.constant 0 : index
    %1 = vector.load %arg2[%c0_1, %c0_2] : memref<128x256xf32, #tpu.memory_space<vmem>>, vector<128x256xf32>
    %cst = arith.constant dense<0.000000e+00> : vector<8x256xf32>
    %2 = tpu.matmul %0, %1, %cst {dimension_numbers = #tpu.dot_dimension_numbers<[1], [0], [0], [1], [0, 0, 1, 1], [], []>} : vector<8x128xf32>, vector<128x256xf32>, vector<8x256xf32> -> vector<8x256xf32>
    %c0_3 = arith.constant 0 : index
    %c0_4 = arith.constant 0 : index
    %3 = vector.load %arg3[%c0_3, %c0_4] : memref<1x256xf32, #tpu.memory_space<vmem>>, vector<1x256xf32>
    %c0_5 = arith.constant 0 : index
    %c0_6 = arith.constant 0 : index
    %4 = vector.load %arg4[%c0_5, %c0_6] : memref<1x256xf32, #tpu.memory_space<vmem>>, vector<1x256xf32>
    %cst_7 = arith.constant dense<0.000000e+00> : vector<256xf32>
    %5 = vector.multi_reduction <add>, %2, %cst_7 [0] : vector<8x256xf32> to vector<256xf32>
    %6 = vector.shape_cast %5 : vector<256xf32> to vector<1x256xf32>
    %cst_8 = arith.constant 8.000000e+00 : f32
    %7 = vector.broadcast %cst_8 : f32 to vector<1x256xf32>
    %8 = arith.divf %6, %7 : vector<1x256xf32>
    %9 = vector.broadcast %8 : vector<1x256xf32> to vector<8x256xf32>
    %10 = arith.subf %2, %9 : vector<8x256xf32>
    %11 = arith.mulf %10, %10 : vector<8x256xf32>
    %cst_9 = arith.constant dense<0.000000e+00> : vector<256xf32>
    %12 = vector.multi_reduction <add>, %11, %cst_9 [0] : vector<8x256xf32> to vector<256xf32>
    %13 = vector.shape_cast %12 : vector<256xf32> to vector<1x256xf32>
    %cst_10 = arith.constant 8.000000e+00 : f32
    %14 = vector.broadcast %cst_10 : f32 to vector<1x256xf32>
    %15 = arith.divf %13, %14 : vector<1x256xf32>
    %cst_11 = arith.constant 9.99999974E-6 : f32
    %16 = vector.broadcast %cst_11 : f32 to vector<1x256xf32>
    %17 = arith.addf %15, %16 : vector<1x256xf32>
    %18 = math.rsqrt %17 : vector<1x256xf32>
    %19 = arith.mulf %3, %18 : vector<1x256xf32>
    %20 = arith.mulf %8, %19 : vector<1x256xf32>
    %21 = arith.subf %4, %20 : vector<1x256xf32>
    %22 = vector.broadcast %19 : vector<1x256xf32> to vector<8x256xf32>
    %23 = arith.mulf %2, %22 : vector<8x256xf32>
    %24 = vector.broadcast %21 : vector<1x256xf32> to vector<8x256xf32>
    %25 = arith.addf %23, %24 : vector<8x256xf32>
    %cst_12 = arith.constant 0.000000e+00 : f32
    %26 = vector.broadcast %cst_12 : f32 to vector<8x256xf32>
    %27 = arith.maximumf %25, %26 : vector<8x256xf32>
    %c0_13 = arith.constant 0 : index
    %c0_14 = arith.constant 0 : index
    %28 = vector.load %arg5[%c0_13, %c0_14] : memref<256x128xf32, #tpu.memory_space<vmem>>, vector<256x128xf32>
    %cst_15 = arith.constant dense<0.000000e+00> : vector<8x128xf32>
    %29 = tpu.matmul %27, %28, %cst_15 {dimension_numbers = #tpu.dot_dimension_numbers<[1], [0], [0], [1], [0, 0, 1, 1], [], []>} : vector<8x256xf32>, vector<256x128xf32>, vector<8x128xf32> -> vector<8x128xf32>
    %c0_16 = arith.constant 0 : index
    %c0_17 = arith.constant 0 : index
    %30 = vector.load %arg6[%c0_16, %c0_17] : memref<1x128xf32, #tpu.memory_space<vmem>>, vector<1x128xf32>
    %31 = vector.broadcast %30 : vector<1x128xf32> to vector<8x128xf32>
    %32 = arith.addf %29, %31 : vector<8x128xf32>
    %c0_18 = arith.constant 0 : index
    %c0_19 = arith.constant 0 : index
    %33 = vector.load %arg7[%c0_18, %c0_19] : memref<8x128xf32, #tpu.memory_space<vmem>>, vector<8x128xf32>
    tpu.vector_store %arg7[%c0_18, %c0_19], %32 {strides = array<i32>} : memref<8x128xf32, #tpu.memory_space<vmem>>, vector<8x128xf32>,
    return
  }
  func.func @transform_0(%arg0: i32) -> (i32, i32) {
    %c0_i32 = arith.constant 0 : i32
    %c0_i32_0 = arith.constant 0 : i32
    %c0_i32_1 = arith.constant 0 : i32
    return %c0_i32, %c0_i32_0 : i32, i32
  }
  func.func @transform_1(%arg0: i32) -> (i32, i32) {
    %c0_i32 = arith.constant 0 : i32
    %c0_i32_0 = arith.constant 0 : i32
    %c0_i32_1 = arith.constant 0 : i32
    return %c0_i32, %c0_i32_0 : i32, i32
  }
  func.func @transform_2(%arg0: i32) -> (i32, i32) {
    %c0_i32 = arith.constant 0 : i32
    %c0_i32_0 = arith.constant 0 : i32
    %c0_i32_1 = arith.constant 0 : i32
    return %c0_i32, %c0_i32_0 : i32, i32
  }
  func.func @transform_3(%arg0: i32) -> (i32, i32) {
    %c0_i32 = arith.constant 0 : i32
    %c0_i32_0 = arith.constant 0 : i32
    %c0_i32_1 = arith.constant 0 : i32
    return %c0_i32, %c0_i32_0 : i32, i32
  }
  func.func @transform_4(%arg0: i32) -> (i32, i32) {
    %c0_i32 = arith.constant 0 : i32
    %c0_i32_0 = arith.constant 0 : i32
    %c0_i32_1 = arith.constant 0 : i32
    return %c0_i32, %c0_i32_0 : i32, i32
  }
  func.func @transform_5(%arg0: i32) -> (i32, i32) {
    %c0_i32 = arith.constant 0 : i32
    %c0_i32_0 = arith.constant 0 : i32
    %c0_i32_1 = arith.constant 0 : i32
    return %c0_i32, %c0_i32_0 : i32, i32
  }
  func.func @transform_6(%arg0: i32) -> (i32, i32) {
    %c0_i32 = arith.constant 0 : i32
    %c0_i32_0 = arith.constant 0 : i32
    %c0_i32_1 = arith.constant 0 : i32
    return %c0_i32, %c0_i32_0 : i32, i32
  }
}

</mosaic_0001>

<llo_original>
// kernel: tpu_custom_call.1
$region0: #{tpu_custom_call.1}
  #allocation0 [shape = 'u32[]', space=smem, size = 0x4, offset = 0x4, fixed_abs, tag = 'smem constant byte address 0x4 - core index']
  #allocation1 [shape = 'u32[144,128]{1,0:T(1,128)}', space=vmem, size = 0x12000, scoped, tag = 'internal scratch']
  %s0 = inlined_call_operand.hbm [shape: f32[8,128], index: 0, kind: input, shape index: {}]
  %s1 = inlined_call_operand.hbm [shape: f32[128,256], index: 1, kind: input, shape index: {}]
  %s2 = inlined_call_operand.vmem [shape: f32[1,256], index: 2, kind: input, shape index: {}]
  %s3 = inlined_call_operand.vmem [shape: f32[1,256], index: 3, kind: input, shape index: {}]
  %s4 = inlined_call_operand.hbm [shape: f32[256,128], index: 4, kind: input, shape index: {}]
  %s5 = inlined_call_operand.vmem [shape: f32[1,128], index: 5, kind: input, shape index: {}]
  %s6 = inlined_call_operand.hbm [shape: f32[8,128], index: 6, kind: output, shape index: {}]
  %s7 = sld [smem:[#allocation0]]
  $region46: #{tpu_custom_call.1} parent=0
    _
  %s9 = ssub.s32 1, %s7
  %s10 = scalar_select 0, %s9, %s7
  $region1: #{tpu_custom_call.1} parent=0
    #allocation2 [shape = 'u8[4096]{0}', space=vmem, size = 0x1000, scoped, tag = 'input window, operand 0, single buffered']
    #allocation3 [shape = 's32[1]{0}', space=sflag, size = 0x4, scoped, tag = 'scoped memory for tpu_custom_call.1']
    #allocation4 [shape = 's32[1]{0}', space=sflag, size = 0x4, scoped, tag = 'scoped memory for tpu_custom_call.1']
    #allocation5 [shape = 'u8[131072]{0}', space=vmem, size = 0x20000, scoped, tag = 'input window, operand 1, single buffered']
    #allocation6 [shape = 's32[1]{0}', space=sflag, size = 0x4, scoped, tag = 'scoped memory for tpu_custom_call.1']
    #allocation7 [shape = 'u8[131072]{0}', space=vmem, size = 0x20000, scoped, tag = 'input window, operand 4, single buffered']
    #allocation8 [shape = 'u8[4096]{0}', space=vmem, size = 0x1000, scoped, tag = 'output window, operand 0, single buffered']
    %11 = vsyncpa [#allocation3], 0
    %12 = vsyncpa [#allocation6], 0
    %13 = vsyncpa [#allocation4], 0
    // Predicated region
    $region2: #{tpu_custom_call.1} parent=1 // pred_check
      _
    $region3: #{tpu_custom_call.1} parent=1 // pred_check_branch
      %15 = sbr.rel (0) target = $region5
    $region4: #{tpu_custom_call.1} parent=1 // pred_region
      %s17 = ssub.s32 128, 128
      %18 = vsyncadd [#allocation3], %s17
      %s20 = sshll.u32 [#allocation2], 4
      %s21 = int_to_ptr.vmem [resolvable:$true] %s20
      %23 = dma.hbm_to_vmem [thread:$0]  %s0, 128, %s21, [#allocation3]
    $region5: #{tpu_custom_call.1} parent=1 // pred_fallthru
      _
    // Predicated region
    $region6: #{tpu_custom_call.1} parent=1 // pred_check
      _
    $region7: #{tpu_custom_call.1} parent=1 // pred_check_branch
      %25 = sbr.rel (0) target = $region9
    $region8: #{tpu_custom_call.1} parent=1 // pred_region
      %s27 = ssub.s32 4096, 4096
      %28 = vsyncadd [#allocation6], %s27
      %s29 = sshll.u32 [#allocation5], 4
      %s30 = int_to_ptr.vmem [resolvable:$true] %s29
      %35 = dma.hbm_to_vmem [thread:$0]  %s1, 4096, %s30, [#allocation6], 256, 256, 16
    $region9: #{tpu_custom_call.1} parent=1 // pred_fallthru
      _
    // Predicated region
    $region10: #{tpu_custom_call.1} parent=1 // pred_check
      _
    $region11: #{tpu_custom_call.1} parent=1 // pred_check_branch
      %37 = sbr.rel (0) target = $region13
    $region12: #{tpu_custom_call.1} parent=1 // pred_region
      _
    $region13: #{tpu_custom_call.1} parent=1 // pred_fallthru
      _
    // Predicated region
    $region14: #{tpu_custom_call.1} parent=1 // pred_check
      _
    $region15: #{tpu_custom_call.1} parent=1 // pred_check_branch
      %39 = sbr.rel (0) target = $region17
    $region16: #{tpu_custom_call.1} parent=1 // pred_region
      _
    $region17: #{tpu_custom_call.1} parent=1 // pred_fallthru
      _
    // Predicated region
    $region18: #{tpu_custom_call.1} parent=1 // pred_check
      _
    $region19: #{tpu_custom_call.1} parent=1 // pred_check_branch
      %41 = sbr.rel (0) target = $region21
    $region20: #{tpu_custom_call.1} parent=1 // pred_region
      %s43 = ssub.s32 4096, 4096
      %44 = vsyncadd [#allocation6], %s43
      %s45 = sshll.u32 [#allocation7], 4
      %s46 = int_to_ptr.vmem [resolvable:$true] %s45
      %51 = dma.hbm_to_vmem [thread:$0]  %s4, 4096, %s46, [#allocation6], 128, 128, 8
    $region21: #{tpu_custom_call.1} parent=1 // pred_fallthru
      _
    // Predicated region
    $region22: #{tpu_custom_call.1} parent=1 // pred_check
      _
    $region23: #{tpu_custom_call.1} parent=1 // pred_check_branch
      %53 = sbr.rel (0) target = $region25
    $region24: #{tpu_custom_call.1} parent=1 // pred_region
      _
    $region25: #{tpu_custom_call.1} parent=1 // pred_fallthru
      _
    // Predicated region
    $region26: #{tpu_custom_call.1} parent=1 // pred_check
      _
    $region27: #{tpu_custom_call.1} parent=1 // pred_check_branch
      %55 = sbr.rel (0) target = $region29
    $region28: #{tpu_custom_call.1} parent=1 // pred_region
      %56 = dma.done [#allocation3], 128
    $region29: #{tpu_custom_call.1} parent=1 // pred_fallthru
      _
    // Predicated region
    $region30: #{tpu_custom_call.1} parent=1 // pred_check
      _
    $region31: #{tpu_custom_call.1} parent=1 // pred_check_branch
      %58 = sbr.rel (0) target = $region33
    $region32: #{tpu_custom_call.1} parent=1 // pred_region
      %59 = dma.done [#allocation6], 4096
    $region33: #{tpu_custom_call.1} parent=1 // pred_fallthru
      _
    // Predicated region
    $region34: #{tpu_custom_call.1} parent=1 // pred_check
      _
    $region35: #{tpu_custom_call.1} parent=1 // pred_check_branch
      %61 = sbr.rel (0) target = $region37
    $region36: #{tpu_custom_call.1} parent=1 // pred_region
      %62 = dma.done [#allocation6], 4096
    $region37: #{tpu_custom_call.1} parent=1 // pred_fallthru
      _
    %v63 = vld [vmem:[#allocation2] sm:$0xff]
    %v64 = vld [vmem:[#allocation5] sm:$0xff]
    %v65 = vld [vmem:[#allocation5 + $0x8] sm:$0xff]
    %v66 = vld [vmem:[#allocation5 + $0x10] sm:$0xff]
    %v67 = vld [vmem:[#allocation5 + $0x18] sm:$0xff]
    %v68 = vld [vmem:[#allocation5 + $0x20] sm:$0xff]
    %v69 = vld [vmem:[#allocation5 + $0x28] sm:$0xff]
    %v70 = vld [vmem:[#allocation5 + $0x30] sm:$0xff]
    %v71 = vld [vmem:[#allocation5 + $0x38] sm:$0xff]
    %v72 = vld [vmem:[#allocation5 + $0x40] sm:$0xff]
    %v73 = vld [vmem:[#allocation5 + $0x48] sm:$0xff]
    %v74 = vld [vmem:[#allocation5 + $0x50] sm:$0xff]
    %v75 = vld [vmem:[#allocation5 + $0x58] sm:$0xff]
    %v76 = vld [vmem:[#allocation5 + $0x60] sm:$0xff]
    %v77 = vld [vmem:[#allocation5 + $0x68] sm:$0xff]
    %v78 = vld [vmem:[#allocation5 + $0x70] sm:$0xff]
    %v79 = vld [vmem:[#allocation5 + $0x78] sm:$0xff]
    %v80 = vld [vmem:[#allocation5 + $0x80] sm:$0xff]
    %v81 = vld [vmem:[#allocation5 + $0x88] sm:$0xff]
    %v82 = vld [vmem:[#allocation5 + $0x90] sm:$0xff]
    %v83 = vld [vmem:[#allocation5 + $0x98] sm:$0xff]
    %v84 = vld [vmem:[#allocation5 + $0xa0] sm:$0xff]
    %v85 = vld [vmem:[#allocation5 + $0xa8] sm:$0xff]
    %v86 = vld [vmem:[#allocation5 + $0xb0] sm:$0xff]
    %v87 = vld [vmem:[#allocation5 + $0xb8] sm:$0xff]
    %v88 = vld [vmem:[#allocation5 + $0xc0] sm:$0xff]
    %v89 = vld [vmem:[#allocation5 + $0xc8] sm:$0xff]
    %v90 = vld [vmem:[#allocation5 + $0xd0] sm:$0xff]
    %v91 = vld [vmem:[#allocation5 + $0xd8] sm:$0xff]
    %v92 = vld [vmem:[#allocation5 + $0xe0] sm:$0xff]
    %v93 = vld [vmem:[#allocation5 + $0xe8] sm:$0xff]
    %v94 = vld [vmem:[#allocation5 + $0xf0] sm:$0xff]
    %v95 = vld [vmem:[#allocation5 + $0xf8] sm:$0xff]
    %96 = vmatprep.subr.mxu0 %v65
    %97 = vmatpush1.msra.mxu0 %v64
    %98 = vmatprep.subr.mxu0 %v67
    %99 = vmatpush1.msra.mxu0 %v66
    %100 = vmatprep.subr.mxu0 %v69
    %101 = vmatpush1.msra.mxu0 %v68
    %102 = vmatprep.subr.mxu0 %v71
    %103 = vmatpush1.msra.mxu0 %v70
    %104 = vmatprep.subr.mxu0 %v73
    %105 = vmatpush1.msra.mxu0 %v72
    %106 = vmatprep.subr.mxu0 %v75
    %107 = vmatpush1.msra.mxu0 %v74
    %108 = vmatprep.subr.mxu0 %v77
    %109 = vmatpush1.msra.mxu0 %v76
    %110 = vmatprep.subr.mxu0 %v79
    %111 = vmatpush1.msra.mxu0 %v78
    %112 = vmatprep.subr.mxu0 %v81
    %113 = vmatpush1.msra.mxu0 %v80
    %114 = vmatprep.subr.mxu0 %v83
    %115 = vmatpush1.msra.mxu0 %v82
    %116 = vmatprep.subr.mxu0 %v85
    %117 = vmatpush1.msra.mxu0 %v84
    %118 = vmatprep.subr.mxu0 %v87
    %119 = vmatpush1.msra.mxu0 %v86
    %120 = vmatprep.subr.mxu0 %v89
    %121 = vmatpush1.msra.mxu0 %v88
    %122 = vmatprep.subr.mxu0 %v91
    %123 = vmatpush1.msra.mxu0 %v90
    %124 = vmatprep.subr.mxu0 %v93
    %125 = vmatpush1.msra.mxu0 %v92
    %126 = vmatprep.subr.mxu0 %v95
    %127 = vmatpush1.msra.mxu0 %v94
    %128 = vmatprep.subr.mxu0 0.0
    %129 = vmatpush1.msra.mxu0 0.0
    %130 = vmatprep.subr.mxu0 0.0
    %131 = vmatpush1.msra.mxu0 0.0
    %132 = vmatprep.subr.mxu0 0.0
    %133 = vmatpush1.msra.mxu0 0.0
    %134 = vmatprep.subr.mxu0 0.0
    %135 = vmatpush1.msra.mxu0 0.0
    %136 = vmatprep.subr.mxu0 0.0
    %137 = vmatpush1.msra.mxu0 0.0
    %138 = vmatprep.subr.mxu0 0.0
    %139 = vmatpush1.msra.mxu0 0.0
    %140 = vmatprep.subr.mxu0 0.0
    %141 = vmatpush1.msra.mxu0 0.0
    %142 = vmatprep.subr.mxu0 0.0
    %143 = vmatpush1.msra.mxu0 0.0
    %144 = vmatprep.subr.mxu0 0.0
    %145 = vmatpush1.msra.mxu0 0.0
    %146 = vmatprep.subr.mxu0 0.0
    %147 = vmatpush1.msra.mxu0 0.0
    %148 = vmatprep.subr.mxu0 0.0
    %149 = vmatpush1.msra.mxu0 0.0
    %150 = vmatprep.subr.mxu0 0.0
    %151 = vmatpush1.msra.mxu0 0.0
    %152 = vmatprep.subr.mxu0 0.0
    %153 = vmatpush1.msra.mxu0 0.0
    %154 = vmatprep.subr.mxu0 0.0
    %155 = vmatpush1.msra.mxu0 0.0
    %156 = vmatprep.subr.mxu0 0.0
    %157 = vmatpush1.msra.mxu0 0.0
    %158 = vmatprep.subr.mxu0 0.0
    %159 = vmatpush1.msra.mxu0 0.0
    %160 = vmatprep.mubr.f32.mxu0 0.0
    %161 = vmatmul.mubr.f32.gmra.mrb[0].mxu0 %v63
    %v162 = vpop.f32.mrb[0].mxu0
    %v163 = vadd.f32 0.0, %v162
    %v164 = vpop.f32.mrb[0].mxu0
    %v165 = vadd.f32 0.0, %v164
    %166 = vdwg.mxu0
    %v167 = vld [vmem:[%s2] sm:$0x3]
    %v168 = vld [vmem:[%s3] sm:$0x3]
    %v169 = vrot.slane %v163, 4
    %v170 = vadd.f32 %v163, %v169
    %v171 = vrot.slane %v170, 2
    %v172 = vadd.f32 %v170, %v171
    %v173 = vrot.slane %v172, 1
    %v174 = vadd.f32 %v172, %v173
    %v175 = vrot.slane %v165, 4
    %v176 = vadd.f32 %v165, %v175
    %v177 = vrot.slane %v176, 2
    %v178 = vadd.f32 %v176, %v177
    %v179 = vrot.slane %v178, 1
    %v180 = vadd.f32 %v178, %v179
    %v181 = vrcp.pop 8.0
    %v182 = vmul.f32 %v174, %v181
    %v183 = vmul.f32 %v180, %v181
    %v184 = vsub.f32 %v163, %v182
    %v185 = vsub.f32 %v165, %v183
    %v186 = vmul.f32 %v184, %v184
    %v187 = vmul.f32 %v185, %v185
    %v188 = vrot.slane %v186, 4
    %v189 = vadd.f32 %v186, %v188
    %v190 = vrot.slane %v189, 2
    %v191 = vadd.f32 %v189, %v190
    %v192 = vrot.slane %v191, 1
    %v193 = vadd.f32 %v191, %v192
    %v194 = vrot.slane %v187, 4
    %v195 = vadd.f32 %v187, %v194
    %v196 = vrot.slane %v195, 2
    %v197 = vadd.f32 %v195, %v196
    %v198 = vrot.slane %v197, 1
    %v199 = vadd.f32 %v197, %v198
    %v200 = vmul.f32 %v193, %v181
    %v201 = vmul.f32 %v199, %v181
    %v202 = vadd.f32 %v200, 1e-05
    %v203 = vadd.f32 %v201, 1e-05
    %v204 = vrsqrt.pop %v202
    %v205 = vrsqrt.pop %v203
    %v208 = vcombine.low %v204, %v205
    %v210 = vunpack.c.l.s4 1966171168
    %v211 = vunpack.c.0.s8 %v210
    %v212 = vlaneseq
    %v213 = vshrl.u32 %v212, 7
    %v214 = vsub.s32 %v211, %v213
    %v215 = vrot.slane %v208, %v214
    %v217 = vunpack.c.l.s4 1966171168
    %v218 = vunpack.c.0.s8 %v217
    %v219 = vlaneseq
    %v220 = vshrl.u32 %v219, 7
    %v221 = vsub.s32 %v218, %v220
    %v222 = vrot.slane %v215, %v221
    %v224 = vmul.f32 %v167, %v222
    %v226 = vlaneseq
    %v227 = vshrl.u32 %v226, 7
    %v228 = vsub.s32 0, %v227
    %v229 = vrot.slane %v224, %v228
    %v230 = vlaneseq
    %v231 = vshrl.u32 %v230, 7
    %v232 = vsub.s32 1, %v231
    %v233 = vrot.slane %v224, %v232
    %v236 = vmul.f32 %v182, %v229
    %v237 = vmul.f32 %v183, %v233
    %v240 = vcombine.low %v236, %v237
    %v242 = vunpack.c.l.s4 1966171168
    %v243 = vunpack.c.0.s8 %v242
    %v244 = vlaneseq
    %v245 = vshrl.u32 %v244, 7
    %v246 = vsub.s32 %v243, %v245
    %v247 = vrot.slane %v240, %v246
    %v249 = vunpack.c.l.s4 1966171168
    %v250 = vunpack.c.0.s8 %v249
    %v251 = vlaneseq
    %v252 = vshrl.u32 %v251, 7
    %v253 = vsub.s32 %v250, %v252
    %v254 = vrot.slane %v247, %v253
    %v256 = vsub.f32 %v168, %v254
    %v257 = vmul.f32 %v163, %v229
    %v258 = vmul.f32 %v165, %v233
    %v260 = vlaneseq
    %v261 = vshrl.u32 %v260, 7
    %v262 = vsub.s32 0, %v261
    %v263 = vrot.slane %v256, %v262
    %v264 = vlaneseq
    %v265 = vshrl.u32 %v264, 7
    %v266 = vsub.s32 1, %v265
    %v267 = vrot.slane %v256, %v266
    %v270 = vadd.f32 %v257, %v263
    %v271 = vadd.f32 %v258, %v267
    %v272 = vmax.f32 %v270, 0.0
    %v273 = vmax.f32 %v271, 0.0
    %v274 = vld [vmem:[#allocation7] sm:$0xff]
    %v275 = vld [vmem:[#allocation7 + $0x8] sm:$0xff]
    %v276 = vld [vmem:[#allocation7 + $0x10] sm:$0xff]
    %v277 = vld [vmem:[#allocation7 + $0x18] sm:$0xff]
    %v278 = vld [vmem:[#allocation7 + $0x20] sm:$0xff]
    %v279 = vld [vmem:[#allocation7 + $0x28] sm:$0xff]
    %v280 = vld [vmem:[#allocation7 + $0x30] sm:$0xff]
    %v281 = vld [vmem:[#allocation7 + $0x38] sm:$0xff]
    %v282 = vld [vmem:[#allocation7 + $0x40] sm:$0xff]
    %v283 = vld [vmem:[#allocation7 + $0x48] sm:$0xff]
    %v284 = vld [vmem:[#allocation7 + $0x50] sm:$0xff]
    %v285 = vld [vmem:[#allocation7 + $0x58] sm:$0xff]
    %v286 = vld [vmem:[#allocation7 + $0x60] sm:$0xff]
    %v287 = vld [vmem:[#allocation7 + $0x68] sm:$0xff]
    %v288 = vld [vmem:[#allocation7 + $0x70] sm:$0xff]
    %v289 = vld [vmem:[#allocation7 + $0x78] sm:$0xff]
    %v290 = vld [vmem:[#allocation7 + $0x80] sm:$0xff]
    %v291 = vld [vmem:[#allocation7 + $0x88] sm:$0xff]
    %v292 = vld [vmem:[#allocation7 + $0x90] sm:$0xff]
    %v293 = vld [vmem:[#allocation7 + $0x98] sm:$0xff]
    %v294 = vld [vmem:[#allocation7 + $0xa0] sm:$0xff]
    %v295 = vld [vmem:[#allocation7 + $0xa8] sm:$0xff]
    %v296 = vld [vmem:[#allocation7 + $0xb0] sm:$0xff]
    %v297 = vld [vmem:[#allocation7 + $0xb8] sm:$0xff]
    %v298 = vld [vmem:[#allocation7 + $0xc0] sm:$0xff]
    %v299 = vld [vmem:[#allocation7 + $0xc8] sm:$0xff]
    %v300 = vld [vmem:[#allocation7 + $0xd0] sm:$0xff]
    %v301 = vld [vmem:[#allocation7 + $0xd8] sm:$0xff]
    %v302 = vld [vmem:[#allocation7 + $0xe0] sm:$0xff]
    %v303 = vld [vmem:[#allocation7 + $0xe8] sm:$0xff]
    %v304 = vld [vmem:[#allocation7 + $0xf0] sm:$0xff]
    %v305 = vld [vmem:[#allocation7 + $0xf8] sm:$0xff]
    %v306 = vld [vmem:[%s5] sm:$0x1]
    %v308 = vlaneseq
    %v309 = vshrl.u32 %v308, 7
    %v310 = vsub.s32 0, %v309
    %v311 = vrot.slane %v306, %v310
    %313 = vmatprep.subr.mxu0 0.0
    %314 = vmatpush1.msra.mxu0 %v274
    %315 = vmatprep.subr.mxu0 0.0
    %316 = vmatpush1.msra.mxu0 %v275
    %317 = vmatprep.subr.mxu0 0.0
    %318 = vmatpush1.msra.mxu0 %v276
    %319 = vmatprep.subr.mxu0 0.0
    %320 = vmatpush1.msra.mxu0 %v277
    %321 = vmatprep.subr.mxu0 0.0
    %322 = vmatpush1.msra.mxu0 %v278
    %323 = vmatprep.subr.mxu0 0.0
    %324 = vmatpush1.msra.mxu0 %v279
    %325 = vmatprep.subr.mxu0 0.0
    %326 = vmatpush1.msra.mxu0 %v280
    %327 = vmatprep.subr.mxu0 0.0
    %328 = vmatpush1.msra.mxu0 %v281
    %329 = vmatprep.subr.mxu0 0.0
    %330 = vmatpush1.msra.mxu0 %v282
    %331 = vmatprep.subr.mxu0 0.0
    %332 = vmatpush1.msra.mxu0 %v283
    %333 = vmatprep.subr.mxu0 0.0
    %334 = vmatpush1.msra.mxu0 %v284
    %335 = vmatprep.subr.mxu0 0.0
    %336 = vmatpush1.msra.mxu0 %v285
    %337 = vmatprep.subr.mxu0 0.0
    %338 = vmatpush1.msra.mxu0 %v286
    %339 = vmatprep.subr.mxu0 0.0
    %340 = vmatpush1.msra.mxu0 %v287
    %341 = vmatprep.subr.mxu0 0.0
    %342 = vmatpush1.msra.mxu0 %v288
    %343 = vmatprep.subr.mxu0 0.0
    %344 = vmatpush1.msra.mxu0 %v289
    %345 = vmatprep.subr.mxu0 0.0
    %346 = vmatpush1.msra.mxu0 %v290
    %347 = vmatprep.subr.mxu0 0.0
    %348 = vmatpush1.msra.mxu0 %v291
    %349 = vmatprep.subr.mxu0 0.0
    %350 = vmatpush1.msra.mxu0 %v292
    %351 = vmatprep.subr.mxu0 0.0
    %352 = vmatpush1.msra.mxu0 %v293
    %353 = vmatprep.subr.mxu0 0.0
    %354 = vmatpush1.msra.mxu0 %v294
    %355 = vmatprep.subr.mxu0 0.0
    %356 = vmatpush1.msra.mxu0 %v295
    %357 = vmatprep.subr.mxu0 0.0
    %358 = vmatpush1.msra.mxu0 %v296
    %359 = vmatprep.subr.mxu0 0.0
    %360 = vmatpush1.msra.mxu0 %v297
    %361 = vmatprep.subr.mxu0 0.0
    %362 = vmatpush1.msra.mxu0 %v298
    %363 = vmatprep.subr.mxu0 0.0
    %364 = vmatpush1.msra.mxu0 %v299
    %365 = vmatprep.subr.mxu0 0.0
    %366 = vmatpush1.msra.mxu0 %v300
    %367 = vmatprep.subr.mxu0 0.0
    %368 = vmatpush1.msra.mxu0 %v301
    %369 = vmatprep.subr.mxu0 0.0
    %370 = vmatpush1.msra.mxu0 %v302
    %371 = vmatprep.subr.mxu0 0.0
    %372 = vmatpush1.msra.mxu0 %v303
    %373 = vmatprep.subr.mxu0 0.0
    %374 = vmatpush1.msra.mxu0 %v304
    %375 = vmatprep.subr.mxu0 0.0
    %376 = vmatpush1.msra.mxu0 %v305
    %377 = vmatprep.mubr.f32.mxu0 %v273
    %378 = vmatmul.mubr.f32.gmra.mrb[0].mxu0 %v272
    %v379 = vpop.f32.mrb[0].mxu0
    %v380 = vadd.f32 %v311, %v379
    %v381 = vpop.f32.mrb[0].mxu0
    %382 = vdwg.mxu0
    %383 = vst [vmem:[#allocation8] sm:$0xff] %v380
    // Predicated region
    $region38: #{tpu_custom_call.1} parent=1 // pred_check
      _
    $region39: #{tpu_custom_call.1} parent=1 // pred_check_branch
      %385 = sbr.rel (0) target = $region41
    $region40: #{tpu_custom_call.1} parent=1 // pred_region
      %s387 = ssub.s32 128, 128
      %388 = vsyncadd [#allocation4], %s387
      %s390 = sshll.u32 [#allocation8], 4
      %s391 = int_to_ptr.vmem [resolvable:$true] %s390
      %393 = dma.vmem_to_hbm [thread:$0]  %s391, 128, %s6, [#allocation4]
    $region41: #{tpu_custom_call.1} parent=1 // pred_fallthru
      _
    // Predicated region
    $region42: #{tpu_custom_call.1} parent=1 // pred_check
      _
    $region43: #{tpu_custom_call.1} parent=1 // pred_check_branch
      %395 = sbr.rel (0) target = $region45
    $region44: #{tpu_custom_call.1} parent=1 // pred_region
      %396 = dma.done [#allocation4], 128
    $region45: #{tpu_custom_call.1} parent=1 // pred_fallthru
      _
    %397 = vsyncpa [#allocation3], 1
    %398 = vsyncpa [#allocation6], 1
    %399 = vsyncpa [#allocation4], 1

</llo_original>
